<compile_context>
chip_gen: v7x
topology: tpu7x:2x2x1
jax: 0.10.0
libtpu: 0.0.40
codegen_flags: <defaults>
</compile_context>

<pallas_src>
import math

import jax
import jax.numpy as jnp
from jax.experimental import pallas as pl
from jax.experimental.pallas import tpu as pltpu

_LANES = 128
_MIN_ROW_TILE = 256     # >=128 KiB per f32 input tile: per-step overhead negligible
_MAX_ROW_TILE = 1024    # ~11.3 MiB double-buffered footprint: fits v5e's 16 MiB scoped VMEM
_TARGET_TILES = 4       # >=2 grid steps -> megacore sharding (v7x) + pipelining


def _round_up(x, m):
    return ((x + m - 1) // m) * m


def _elementwise_kernel(x1_ref, x2_ref, x3_ref, x4_ref, x5_ref,
                        add_ref, sub_ref, mul_ref, div_ref, pow_ref,
                        gt_ref, lt_ref, eq_ref, ne_ref, land_ref):
    x1 = x1_ref[...]
    x2 = x2_ref[...]
    x3 = x3_ref[...]
    x4 = x4_ref[...]
    x5 = x5_ref[...]

    # Arithmetic outputs (float32).
    add_ref[...] = x1 + x2                  # addition
    sub_ref[...] = x3 - x4                  # subtraction
    mul_ref[...] = x2 * x5                  # multiplication
    div_ref[...] = x4 / (x3 + 1e-05)        # division (exact module semantics)
    pow_ref[...] = x1 * x1                  # power (x1 ** 2)

    # Comparison / logical outputs.  .astype(ref.dtype) is a no-op when the
    # output dtype is bool and a cheap mask->i8 move for the uint8 fallback.
    gt = x2 > x3
    lt = x4 < x5
    gt_ref[...] = gt.astype(gt_ref.dtype)
    lt_ref[...] = lt.astype(lt_ref.dtype)
    eq_ref[...] = (x1 == x2).astype(eq_ref.dtype)
    ne_ref[...] = (x3 != x5).astype(ne_ref.dtype)
    land_ref[...] = jnp.logical_and(gt, lt).astype(land_ref.dtype)


# ----------------------------------------------------------------------------
# One-time probe: can Mosaic lower bool-dtype VMEM stores for a tiled output?
# If yes we emit bool directly from the kernel (no wrapper astype pass); if
# not we fall back to uint8 storage + a wrapper-side conversion.
# ----------------------------------------------------------------------------
_BOOL_OUT_SUPPORTED = None


def _probe_kernel(x_ref, o_ref):
    o_ref[...] = x_ref[...] > 0.0


def _bool_outputs_supported():
    global _BOOL_OUT_SUPPORTED
    if _BOOL_OUT_SUPPORTED is None:
        try:
            x = jax.lax.broadcasted_iota(jnp.float32, (64, _LANES), 0) - 31.5
            spec = pl.BlockSpec((32, _LANES), lambda i: (i, 0))
            out = pl.pallas_call(
                _probe_kernel,
                out_shape=jax.ShapeDtypeStruct((64, _LANES), jnp.bool_),
                grid=(2,),
                in_specs=[spec],
                out_specs=spec,
            )(x)
            out = jax.block_until_ready(out)
            _BOOL_OUT_SUPPORTED = bool(jnp.array_equal(out, x > 0.0))
        except Exception:
            _BOOL_OUT_SUPPORTED = False
    return _BOOL_OUT_SUPPORTED


def pt_module_forward(x1, x2, x3, x4, x5):
    """Reproduces PtModule.forward for same-shaped float32 inputs."""
    orig_shape = x1.shape
    dtype = x1.dtype

    # Static (host-side) element count -- no device round-trip.
    total = math.prod(orig_shape) if orig_shape else 1

    bool_dtype = jnp.bool_ if _bool_outputs_supported() else jnp.uint8

    # Lane-dense (rows, 128) view.  For 128-divisible element counts this is a
    # free reshape (no pad, no output slice).  Only genuinely awkward totals
    # take the (rare) pad/slice fallback.
    if total % _LANES == 0:
        rows = total // _LANES
        padded_total = total

        def prep(a):
            return a.reshape(rows, _LANES)
    else:
        rows = pl.cdiv(total, _LANES)
        padded_total = rows * _LANES

        def prep(a):
            # Zero padding is safe for every op here (div uses x3 + 1e-5).
            flat = jnp.pad(a.reshape(-1), (0, padded_total - total))
            return flat.reshape(rows, _LANES)

    xs = [prep(a) for a in (x1, x2, x3, x4, x5)]

    # Row-tile selection: multiple of 32 (clean 8-bit-output stores), clamped
    # to [_MIN_ROW_TILE, _MAX_ROW_TILE], aiming for >= _TARGET_TILES steps.
    # A ragged last tile is handled by Pallas (masked writeback).
    row_tile = _round_up(pl.cdiv(rows, _TARGET_TILES), 32)
    row_tile = max(_MIN_ROW_TILE, min(_MAX_ROW_TILE, row_tile))
    if row_tile >= rows:
        row_tile = rows  # single full-extent block (always a legal block shape)
    num_tiles = pl.cdiv(rows, row_tile)

    spec = pl.BlockSpec((row_tile, _LANES), lambda i: (i, 0))
    f_shape = jax.ShapeDtypeStruct((rows, _LANES), dtype)
    b_shape = jax.ShapeDtypeStruct((rows, _LANES), bool_dtype)

    outs = pl.pallas_call(
        _elementwise_kernel,
        out_shape=(f_shape,) * 5 + (b_shape,) * 5,
        grid=(num_tiles,),
        in_specs=[spec] * 5,
        out_specs=(spec,) * 10,
        compiler_params=pltpu.CompilerParams(
            dimension_semantics=("parallel",),
            vmem_limit_bytes=32 * 1024 * 1024,
        ),
        cost_estimate=pl.CostEstimate(
            flops=10 * total,
            transcendentals=0,
            bytes_accessed=45 * total,  # 5 f32 in + 5 f32 out + 5 byte-wide out
        ),
    )(*xs)

    def unflat(a, to_bool=False):
        a = a.reshape(padded_total)
        if padded_total != total:
            a = a[:total]
        a = a.reshape(orig_shape)
        if to_bool and a.dtype != jnp.bool_:
            a = a != 0  # only taken on the uint8 fallback path
        return a

    addition, subtraction, multiplication, division, power = [
        unflat(o) for o in outs[:5]
    ]
    greater_than, less_than, equal_to, not_equal_to, logical_and = [
        unflat(o, to_bool=True) for o in outs[5:]
    ]

    return (addition, subtraction, multiplication, division, power,
            greater_than, less_than, equal_to, not_equal_to, logical_and)


if __name__ == "__main__":
    key = jax.random.PRNGKey(0)
    shape = (2, 4, 16, 16)  # NCHW
    k1, k2, k3, k4, k5 = jax.random.split(key, 5)
    x1 = jax.random.normal(k1, shape, dtype=jnp.float32)
    x2 = jax.random.normal(k2, shape, dtype=jnp.float32)
    x3 = jax.random.normal(k3, shape, dtype=jnp.float32)
    x4 = jax.random.normal(k4, shape, dtype=jnp.float32)
    x5 = jax.random.normal(k5, shape, dtype=jnp.float32)

    outs = pt_module_forward(x1, x2, x3, x4, x5)
    outs = jax.block_until_ready(outs)

    # Sanity check against plain JAX reference (same semantics as PtModule).
    ref = (x1 + x2, x3 - x4, x2 * x5, x4 / (x3 + 1e-05), x1 ** 2,
           x2 > x3, x4 < x5, x1 == x2, x3 != x5,
           jnp.logical_and(x2 > x3, x4 < x5))
    for o, r in zip(outs, ref):
        assert o.dtype == r.dtype, (o.dtype, r.dtype)
        assert o.shape == r.shape, (o.shape, r.shape)
        if o.dtype == jnp.bool_:
            assert bool(jnp.all(o == r))
        else:
            assert bool(jnp.allclose(o, r, atol=1e-6))

    print("KERNEL_OK")
</pallas_src>

<mosaic_0001>
module attributes {stable_mosaic.version = 11 : i64} {
  func.func @_probe_kernel(%arg0: i32, %arg1: memref<32x128xf32, #tpu.memory_space<vmem>>, %arg2: memref<32x128xi32, #tpu.memory_space<vmem>>) attributes {dimension_semantics = [#tpu.dimension_semantics<arbitrary>], iteration_bounds = array<i64: 2>, scalar_prefetch = 0 : i64, scratch_operands = 0 : i64, tpu.core_type = #tpu.core_type<tc>, window_params = [{transform_indices = @transform_0, window_bounds = array<i64: 32, 128>}, {transform_indices = @transform_1, window_bounds = array<i64: 32, 128>}]} {
    %c0 = arith.constant 0 : index
    %c0_0 = arith.constant 0 : index
    %0 = vector.load %arg1[%c0, %c0_0] : memref<32x128xf32, #tpu.memory_space<vmem>>, vector<32x128xf32>
    %cst = arith.constant 0.000000e+00 : f32
    %1 = vector.broadcast %cst : f32 to vector<32x128xf32>
    %2 = arith.cmpf ogt, %0, %1 : vector<32x128xf32>
    %c0_1 = arith.constant 0 : index
    %c0_2 = arith.constant 0 : index
    %3 = vector.load %arg2[%c0_1, %c0_2] : memref<32x128xi32, #tpu.memory_space<vmem>>, vector<32x128xi32>
    %4 = arith.extui %2 : vector<32x128xi1> to vector<32x128xi32>
    %cst_3 = arith.constant dense<0> : vector<32x128xi32>
    %5 = arith.cmpi ne, %3, %cst_3 : vector<32x128xi32>
    tpu.vector_store %arg2[%c0_1, %c0_2], %4 {strides = array<i32>} : memref<32x128xi32, #tpu.memory_space<vmem>>, vector<32x128xi32>,
    return
  }
  func.func @transform_0(%arg0: i32) -> (i32, i32) {
    %c0_i32 = arith.constant 0 : i32
    %c0_i32_0 = arith.constant 0 : i32
    return %arg0, %c0_i32 : i32, i32
  }
  func.func @transform_1(%arg0: i32) -> (i32, i32) {
    %c0_i32 = arith.constant 0 : i32
    %c0_i32_0 = arith.constant 0 : i32
    return %arg0, %c0_i32 : i32, i32
  }
}

module attributes {stable_mosaic.version = 11 : i64} {
  func.func @_elementwise_kernel(%arg0: i32, %arg1: memref<16x128xf32, #tpu.memory_space<vmem>>, %arg2: memref<16x128xf32, #tpu.memory_space<vmem>>, %arg3: memref<16x128xf32, #tpu.memory_space<vmem>>, %arg4: memref<16x128xf32, #tpu.memory_space<vmem>>, %arg5: memref<16x128xf32, #tpu.memory_space<vmem>>, %arg6: memref<16x128xf32, #tpu.memory_space<vmem>>, %arg7: memref<16x128xf32, #tpu.memory_space<vmem>>, %arg8: memref<16x128xf32, #tpu.memory_space<vmem>>, %arg9: memref<16x128xf32, #tpu.memory_space<vmem>>, %arg10: memref<16x128xf32, #tpu.memory_space<vmem>>, %arg11: memref<16x128xi8, #tpu.memory_space<vmem>>, %arg12: memref<16x128xi8, #tpu.memory_space<vmem>>, %arg13: memref<16x128xi8, #tpu.memory_space<vmem>>, %arg14: memref<16x128xi8, #tpu.memory_space<vmem>>, %arg15: memref<16x128xi8, #tpu.memory_space<vmem>>) attributes {dimension_semantics = [#tpu.dimension_semantics<parallel>], iteration_bounds = array<i64: 1>, scalar_prefetch = 0 : i64, scratch_operands = 0 : i64, tpu.core_type = #tpu.core_type<tc>, window_params = [{transform_indices = @transform_0, window_bounds = array<i64: 16, 128>}, {transform_indices = @transform_1, window_bounds = array<i64: 16, 128>}, {transform_indices = @transform_2, window_bounds = array<i64: 16, 128>}, {transform_indices = @transform_3, window_bounds = array<i64: 16, 128>}, {transform_indices = @transform_4, window_bounds = array<i64: 16, 128>}, {transform_indices = @transform_5, window_bounds = array<i64: 16, 128>}, {transform_indices = @transform_6, window_bounds = array<i64: 16, 128>}, {transform_indices = @transform_7, window_bounds = array<i64: 16, 128>}, {transform_indices = @transform_8, window_bounds = array<i64: 16, 128>}, {transform_indices = @transform_9, window_bounds = array<i64: 16, 128>}, {transform_indices = @transform_10, window_bounds = array<i64: 16, 128>}, {transform_indices = @transform_11, window_bounds = array<i64: 16, 128>}, {transform_indices = @transform_12, window_bounds = array<i64: 16, 128>}, {transform_indices = @transform_13, window_bounds = array<i64: 16, 128>}, {transform_indices = @transform_14, window_bounds = array<i64: 16, 128>}]} {
    %c0 = arith.constant 0 : index
    %c0_0 = arith.constant 0 : index
    %0 = vector.load %arg1[%c0, %c0_0] : memref<16x128xf32, #tpu.memory_space<vmem>>, vector<16x128xf32>
    %c0_1 = arith.constant 0 : index
    %c0_2 = arith.constant 0 : index
    %1 = vector.load %arg2[%c0_1, %c0_2] : memref<16x128xf32, #tpu.memory_space<vmem>>, vector<16x128xf32>
    %c0_3 = arith.constant 0 : index
    %c0_4 = arith.constant 0 : index
    %2 = vector.load %arg3[%c0_3, %c0_4] : memref<16x128xf32, #tpu.memory_space<vmem>>, vector<16x128xf32>
    %c0_5 = arith.constant 0 : index
    %c0_6 = arith.constant 0 : index
    %3 = vector.load %arg4[%c0_5, %c0_6] : memref<16x128xf32, #tpu.memory_space<vmem>>, vector<16x128xf32>
    %c0_7 = arith.constant 0 : index
    %c0_8 = arith.constant 0 : index
    %4 = vector.load %arg5[%c0_7, %c0_8] : memref<16x128xf32, #tpu.memory_space<vmem>>, vector<16x128xf32>
    %5 = arith.addf %0, %1 : vector<16x128xf32>
    %c0_9 = arith.constant 0 : index
    %c0_10 = arith.constant 0 : index
    %6 = vector.load %arg6[%c0_9, %c0_10] : memref<16x128xf32, #tpu.memory_space<vmem>>, vector<16x128xf32>
    tpu.vector_store %arg6[%c0_9, %c0_10], %5 {strides = array<i32>} : memref<16x128xf32, #tpu.memory_space<vmem>>, vector<16x128xf32>,
    %7 = arith.subf %2, %3 : vector<16x128xf32>
    %c0_11 = arith.constant 0 : index
    %c0_12 = arith.constant 0 : index
    %8 = vector.load %arg7[%c0_11, %c0_12] : memref<16x128xf32, #tpu.memory_space<vmem>>, vector<16x128xf32>
    tpu.vector_store %arg7[%c0_11, %c0_12], %7 {strides = array<i32>} : memref<16x128xf32, #tpu.memory_space<vmem>>, vector<16x128xf32>,
    %9 = arith.mulf %1, %4 : vector<16x128xf32>
    %c0_13 = arith.constant 0 : index
    %c0_14 = arith.constant 0 : index
    %10 = vector.load %arg8[%c0_13, %c0_14] : memref<16x128xf32, #tpu.memory_space<vmem>>, vector<16x128xf32>
    tpu.vector_store %arg8[%c0_13, %c0_14], %9 {strides = array<i32>} : memref<16x128xf32, #tpu.memory_space<vmem>>, vector<16x128xf32>,
    %cst = arith.constant 9.99999974E-6 : f32
    %11 = vector.broadcast %cst : f32 to vector<16x128xf32>
    %12 = arith.addf %2, %11 : vector<16x128xf32>
    %13 = arith.divf %3, %12 : vector<16x128xf32>
    %c0_15 = arith.constant 0 : index
    %c0_16 = arith.constant 0 : index
    %14 = vector.load %arg9[%c0_15, %c0_16] : memref<16x128xf32, #tpu.memory_space<vmem>>, vector<16x128xf32>
    tpu.vector_store %arg9[%c0_15, %c0_16], %13 {strides = array<i32>} : memref<16x128xf32, #tpu.memory_space<vmem>>, vector<16x128xf32>,
    %15 = arith.mulf %0, %0 : vector<16x128xf32>
    %c0_17 = arith.constant 0 : index
    %c0_18 = arith.constant 0 : index
    %16 = vector.load %arg10[%c0_17, %c0_18] : memref<16x128xf32, #tpu.memory_space<vmem>>, vector<16x128xf32>
    tpu.vector_store %arg10[%c0_17, %c0_18], %15 {strides = array<i32>} : memref<16x128xf32, #tpu.memory_space<vmem>>, vector<16x128xf32>,
    %17 = arith.cmpf ogt, %1, %2 : vector<16x128xf32>
    %18 = arith.cmpf olt, %3, %4 : vector<16x128xf32>
    %19 = arith.extui %17 : vector<16x128xi1> to vector<16x128xi8>
    %c0_19 = arith.constant 0 : index
    %c0_20 = arith.constant 0 : index
    %20 = vector.load %arg11[%c0_19, %c0_20] : memref<16x128xi8, #tpu.memory_space<vmem>>, vector<16x128xi8>
    tpu.vector_store %arg11[%c0_19, %c0_20], %19 {strides = array<i32>} : memref<16x128xi8, #tpu.memory_space<vmem>>, vector<16x128xi8>,
    %21 = arith.extui %18 : vector<16x128xi1> to vector<16x128xi8>
    %c0_21 = arith.constant 0 : index
    %c0_22 = arith.constant 0 : index
    %22 = vector.load %arg12[%c0_21, %c0_22] : memref<16x128xi8, #tpu.memory_space<vmem>>, vector<16x128xi8>
    tpu.vector_store %arg12[%c0_21, %c0_22], %21 {strides = array<i32>} : memref<16x128xi8, #tpu.memory_space<vmem>>, vector<16x128xi8>,
    %23 = arith.cmpf oeq, %0, %1 : vector<16x128xf32>
    %24 = arith.extui %23 : vector<16x128xi1> to vector<16x128xi8>
    %c0_23 = arith.constant 0 : index
    %c0_24 = arith.constant 0 : index
    %25 = vector.load %arg13[%c0_23, %c0_24] : memref<16x128xi8, #tpu.memory_space<vmem>>, vector<16x128xi8>
    tpu.vector_store %arg13[%c0_23, %c0_24], %24 {strides = array<i32>} : memref<16x128xi8, #tpu.memory_space<vmem>>, vector<16x128xi8>,
    %26 = arith.cmpf one, %2, %4 : vector<16x128xf32>
    %27 = arith.extui %26 : vector<16x128xi1> to vector<16x128xi8>
    %c0_25 = arith.constant 0 : index
    %c0_26 = arith.constant 0 : index
    %28 = vector.load %arg14[%c0_25, %c0_26] : memref<16x128xi8, #tpu.memory_space<vmem>>, vector<16x128xi8>
    tpu.vector_store %arg14[%c0_25, %c0_26], %27 {strides = array<i32>} : memref<16x128xi8, #tpu.memory_space<vmem>>, vector<16x128xi8>,
    %29 = arith.andi %17, %18 : vector<16x128xi1>
    %30 = arith.extui %29 : vector<16x128xi1> to vector<16x128xi8>
    %c0_27 = arith.constant 0 : index
    %c0_28 = arith.constant 0 : index
    %31 = vector.load %arg15[%c0_27, %c0_28] : memref<16x128xi8, #tpu.memory_space<vmem>>, vector<16x128xi8>
    tpu.vector_store %arg15[%c0_27, %c0_28], %30 {strides = array<i32>} : memref<16x128xi8, #tpu.memory_space<vmem>>, vector<16x128xi8>,
    return
  }
  func.func @transform_0(%arg0: i32) -> (i32, i32) {
    %c0_i32 = arith.constant 0 : i32
    %c0_i32_0 = arith.constant 0 : i32
    return %arg0, %c0_i32 : i32, i32
  }
  func.func @transform_1(%arg0: i32) -> (i32, i32) {
    %c0_i32 = arith.constant 0 : i32
    %c0_i32_0 = arith.constant 0 : i32
    return %arg0, %c0_i32 : i32, i32
  }
  func.func @transform_2(%arg0: i32) -> (i32, i32) {
    %c0_i32 = arith.constant 0 : i32
    %c0_i32_0 = arith.constant 0 : i32
    return %arg0, %c0_i32 : i32, i32
  }
  func.func @transform_3(%arg0: i32) -> (i32, i32) {
    %c0_i32 = arith.constant 0 : i32
    %c0_i32_0 = arith.constant 0 : i32
    return %arg0, %c0_i32 : i32, i32
  }
  func.func @transform_4(%arg0: i32) -> (i32, i32) {
    %c0_i32 = arith.constant 0 : i32
    %c0_i32_0 = arith.constant 0 : i32
    return %arg0, %c0_i32 : i32, i32
  }
  func.func @transform_5(%arg0: i32) -> (i32, i32) {
    %c0_i32 = arith.constant 0 : i32
    %c0_i32_0 = arith.constant 0 : i32
    return %arg0, %c0_i32 : i32, i32
  }
  func.func @transform_6(%arg0: i32) -> (i32, i32) {
    %c0_i32 = arith.constant 0 : i32
    %c0_i32_0 = arith.constant 0 : i32
    return %arg0, %c0_i32 : i32, i32
  }
  func.func @transform_7(%arg0: i32) -> (i32, i32) {
    %c0_i32 = arith.constant 0 : i32
    %c0_i32_0 = arith.constant 0 : i32
    return %arg0, %c0_i32 : i32, i32
  }
  func.func @transform_8(%arg0: i32) -> (i32, i32) {
    %c0_i32 = arith.constant 0 : i32
    %c0_i32_0 = arith.constant 0 : i32
    return %arg0, %c0_i32 : i32, i32
  }
  func.func @transform_9(%arg0: i32) -> (i32, i32) {
    %c0_i32 = arith.constant 0 : i32
    %c0_i32_0 = arith.constant 0 : i32
    return %arg0, %c0_i32 : i32, i32
  }
  func.func @transform_10(%arg0: i32) -> (i32, i32) {
    %c0_i32 = arith.constant 0 : i32
    %c0_i32_0 = arith.constant 0 : i32
    return %arg0, %c0_i32 : i32, i32
  }
  func.func @transform_11(%arg0: i32) -> (i32, i32) {
    %c0_i32 = arith.constant 0 : i32
    %c0_i32_0 = arith.constant 0 : i32
    return %arg0, %c0_i32 : i32, i32
  }
  func.func @transform_12(%arg0: i32) -> (i32, i32) {
    %c0_i32 = arith.constant 0 : i32
    %c0_i32_0 = arith.constant 0 : i32
    return %arg0, %c0_i32 : i32, i32
  }
  func.func @transform_13(%arg0: i32) -> (i32, i32) {
    %c0_i32 = arith.constant 0 : i32
    %c0_i32_0 = arith.constant 0 : i32
    return %arg0, %c0_i32 : i32, i32
  }
  func.func @transform_14(%arg0: i32) -> (i32, i32) {
    %c0_i32 = arith.constant 0 : i32
    %c0_i32_0 = arith.constant 0 : i32
    return %arg0, %c0_i32 : i32, i32
  }
}

</mosaic_0001>

<llo_original>
// kernel: tpu_custom_call.1
$region0: #{tpu_custom_call.1}
  #allocation0 [shape = 'u32[]', space=smem, size = 0x4, offset = 0x4, fixed_abs, tag = 'smem constant byte address 0x4 - core index']
  #allocation1 [shape = 'u32[144,128]{1,0:T(1,128)}', space=vmem, size = 0x12000, scoped, tag = 'internal scratch']
  %s0 = inlined_call_operand.hbm [shape: f32[64,128], index: 0, kind: input, shape index: {}]
  %s1 = inlined_call_operand.vmem [shape: s32[64,128], index: 1, kind: output, shape index: {}]
  %s2 = sld [smem:[#allocation0]]
  $region41: #{tpu_custom_call.1} parent=0
    _
  %s4 = ssub.s32 1, %s2
  %s5 = scalar_select 0, %s4, %s2
  $region1: #{tpu_custom_call.1} parent=0
    #allocation2 [shape = 'u8[32768]{0}', space=vmem, size = 0x8000, scoped, tag = 'input window, operand 0']
    #allocation3 [shape = 's32[2]{0}', space=sflag, size = 0x8, scoped, tag = 'scoped memory for tpu_custom_call.1']
    %6 = vsyncpa [#allocation3], 0
    %s7 = scalar_lea.sflag [#allocation3], 1
    %8 = vsyncpa %s7, 0
    loop: start=0, step=1, limit=4
    $region2: #{tpu_custom_call.1} parent=1 // loop_pre_header
      _
    $region3: #{tpu_custom_call.1} parent=1 // loop_header
      %s10 = sphi 0, %s14
      %p11 = scmp.ge.s32.totalorder %s10, 4
      %s20 = sphi 0, %s22
      %s23 = sphi 0, %s20
      %s24 = sphi 0, %s23
      %s40 = sphi 0, %s24
      %s46 = sphi 0, %s48
      %s49 = sphi 0, %s46
      %s50 = sphi 0, %s49
      %s66 = sphi 0, %s50
    $region4: #{tpu_custom_call.1} parent=1 // loop_header_branch
      %13 = sbr.rel (%p11) target = $region8
    $region5: #{tpu_custom_call.1} parent=1 // loop_body
      %s15 = ssub.s32 %s10, 1
      %s16 = ssub.s32 %s10, 2
      %s17 = sadd.s32 %s10, 1
      %s18 = ssub.s32 %s10, %s17
      %p19 = scmp.eq.s32.totalorder %s18, 0
      %s21 = sadd.s32 %s20, 1
      %s22 = scalar_select %p19, %s20, %s21
      %p25 = pneg %p19
      %p26 = scmp.eq.s32.totalorder %s10, 1
      %p27 = por %p25, %p26
      %p28 = scmp.ne.s32.totalorder %s20, %s23
      %p29 = scmp.eq.s32.totalorder %s10, 0
      %p30 = por %p28, %p29
      %p31 = scmp.ne.s32.totalorder %s20, %s23
      %p32 = scmp.eq.s32.totalorder %s15, 1
      %p33 = por %p31, %p32
      %p34 = scmp.ne.s32.totalorder %s23, %s24
      %p35 = scmp.eq.s32.totalorder %s15, 0
      %p36 = por %p34, %p35
      %p37 = scmp.ne.s32.totalorder %s23, %s24
      %p38 = scmp.eq.s32.totalorder %s16, 1
      %p39 = por %p37, %p38
      %p41 = scmp.ne.s32.totalorder %s24, %s40
      %p42 = scmp.eq.s32.totalorder %s16, 0
      %p43 = por %p41, %p42
      %s44 = ssub.s32 %s10, %s17
      %p45 = scmp.eq.s32.totalorder %s44, 0
      %s47 = sadd.s32 %s46, 1
      %s48 = scalar_select %p45, %s46, %s47
      %p51 = pneg %p45
      %p52 = scmp.eq.s32.totalorder %s10, 1
      %p53 = por %p51, %p52
      %p54 = scmp.ne.s32.totalorder %s46, %s49
      %p55 = scmp.eq.s32.totalorder %s10, 0
      %p56 = por %p54, %p55
      %p57 = scmp.ne.s32.totalorder %s46, %s49
      %p58 = scmp.eq.s32.totalorder %s15, 1
      %p59 = por %p57, %p58
      %p60 = scmp.ne.s32.totalorder %s49, %s50
      %p61 = scmp.eq.s32.totalorder %s15, 0
      %p62 = por %p60, %p61
      %p63 = scmp.ne.s32.totalorder %s49, %s50
      %p64 = scmp.eq.s32.totalorder %s16, 1
      %p65 = por %p63, %p64
      %p67 = scmp.ne.s32.totalorder %s50, %s66
      %p68 = scmp.eq.s32.totalorder %s16, 0
      %p69 = por %p67, %p68
      %p70 = scmp.le.s32.totalorder 1, %s10
      %p71 = scmp.lt.s32.totalorder %s10, 3
      %p72 = pnand %p70, %p71
      %p73 = pneg %p72
      // Predicated region
      $region9: #{tpu_custom_call.1} parent=5 // pred_check
        _
      $region10: #{tpu_custom_call.1} parent=5 // pred_check_branch
        %75 = sbr.rel (%p72) target = $region12
      $region11: #{tpu_custom_call.1} parent=5 // pred_region
        %s76 = ssub.s32 %s10, 1
      $region12: #{tpu_custom_call.1} parent=5 // pred_fallthru
        _
      %p77 = scmp.lt.s32.totalorder %s10, 2
      // Predicated region
      $region13: #{tpu_custom_call.1} parent=5 // pred_check
        %p78 = pneg %p77
      $region14: #{tpu_custom_call.1} parent=5 // pred_check_branch
        %80 = sbr.rel (%p78) target = $region16
      $region15: #{tpu_custom_call.1} parent=5 // pred_region
        // Predicated region
        $region17: #{tpu_custom_call.1} parent=15 // pred_check
          %p81 = pneg %p30
        $region18: #{tpu_custom_call.1} parent=15 // pred_check_branch
          %83 = sbr.rel (%p81) target = $region20
        $region19: #{tpu_custom_call.1} parent=15 // pred_region
          %s84 = sand.u32 %s20, 1
          %s85 = scalar_lea.sflag [#allocation3], %s84
          %s86 = sand.u32 %s20, 1
          %s87 = smul.addr %s86, 32
          %s88 = scalar_lea.vmem [#allocation2], %s87
          %s89 = smul.u32 4, %s10
          %s91 = ssub.s32 512, 512
          %92 = vsyncadd %s85, %s91
          %s93 = smul.addr %s89, 128
          %s94 = scalar_lea.hbm %s0, %s93
          %s95 = sshll.u32 %s88, 4
          %s96 = int_to_ptr.vmem [resolvable:$true] %s95
          %101 = dma.hbm_to_vmem [thread:$0]  %s94, 512, %s96, %s85, 128, 128, 8
        $region20: #{tpu_custom_call.1} parent=15 // pred_fallthru
          _
      $region16: #{tpu_custom_call.1} parent=5 // pred_fallthru
        _
      %p102 = scmp.le.s32.totalorder 1, %s10
      %p103 = scmp.lt.s32.totalorder %s10, 3
      %p104 = pnand %p102, %p103
      %p105 = pneg %p104
      // Predicated region
      $region21: #{tpu_custom_call.1} parent=5 // pred_check
        _
      $region22: #{tpu_custom_call.1} parent=5 // pred_check_branch
        %107 = sbr.rel (%p104) target = $region24
      $region23: #{tpu_custom_call.1} parent=5 // pred_region
        %s108 = ssub.s32 %s10, 1
        %s109 = sand.u32 %s23, 1
        %s110 = scalar_lea.sflag [#allocation3], %s109
        %s111 = sand.u32 %s23, 1
        %s112 = smul.addr %s111, 32
        %s113 = scalar_lea.vmem [#allocation2], %s112
        // Predicated region
        $region25: #{tpu_custom_call.1} parent=23 // pred_check
          %p114 = pneg %p36
        $region26: #{tpu_custom_call.1} parent=23 // pred_check_branch
          %116 = sbr.rel (%p114) target = $region28
        $region27: #{tpu_custom_call.1} parent=23 // pred_region
          %117 = dma.done %s110, 512
        $region28: #{tpu_custom_call.1} parent=23 // pred_fallthru
          _
        %s118 = sand.u32 %s23, 1
        %s119 = scalar_lea.sflag [#allocation3], %s118
        %s120 = sand.u32 %s23, 1
        %s121 = smul.addr %s120, 32
        %s122 = scalar_lea.vmem [#allocation2], %s121
        %p123 = pneg %p36
        %p124 = pneg %p33
        %p125 = pneg %p62
        %p126 = pneg %p59
        %s127 = smul.u32 4, %s15
        %p128 = scmp.lt.s32.totalorder %s127, 7
        %s129 = scalar_select %p128, %s127, 7
        %s130 = smul.addr %s129, 8
        %s131 = scalar_lea.vmem %s1, %s130
        %s132 = smul.u32 4, %s15
        %s133 = smul.u32 4, %s15
        %p134 = scmp.lt.s32.totalorder %s133, 7
        %s135 = scalar_select %p134, %s133, 7
        %s136 = smul.addr %s135, 8
        %s137 = scalar_lea.vmem %s1, %s136
        %s138 = smul.u32 4, %s15
        %v139 = vld [vmem:[%s113] sm:$0xff]
        %v140 = vld [vmem:[%s113 + $0x8] sm:$0xff]
        %v141 = vld [vmem:[%s113 + $0x10] sm:$0xff]
        %v142 = vld [vmem:[%s113 + $0x18] sm:$0xff]
        %vm143 = vcmp.gt.f32.partialorder %v139, 0.0
        %vm144 = vcmp.gt.f32.partialorder %v140, 0.0
        %vm145 = vcmp.gt.f32.partialorder %v141, 0.0
        %vm146 = vcmp.gt.f32.partialorder %v142, 0.0
        %v147 = vsel %vm143, 1, 0
        %v148 = vsel %vm144, 1, 0
        %v149 = vsel %vm145, 1, 0
        %v150 = vsel %vm146, 1, 0
        %151 = vst [vmem:[%s137] sm:$0xff] %v147
        %152 = vst [vmem:[%s137 + $0x8] sm:$0xff] %v148
        %153 = vst [vmem:[%s137 + $0x10] sm:$0xff] %v149
        %154 = vst [vmem:[%s137 + $0x18] sm:$0xff] %v150
        %s155 = smul.u32 4, %s15
        %p156 = scmp.lt.s32.totalorder %s155, 7
        %s157 = scalar_select %p156, %s155, 7
        %s158 = smul.addr %s157, 8
        %s159 = scalar_lea.vmem %s1, %s158
        // Predicated region
        $region29: #{tpu_custom_call.1} parent=23 // pred_check
          %p160 = pneg %p59
        $region30: #{tpu_custom_call.1} parent=23 // pred_check_branch
          %162 = sbr.rel (%p160) target = $region32
        $region31: #{tpu_custom_call.1} parent=23 // pred_region
          %s163 = smul.u32 4, %s15
        $region32: #{tpu_custom_call.1} parent=23 // pred_fallthru
          _
      $region24: #{tpu_custom_call.1} parent=5 // pred_fallthru
        _
      %p164 = scmp.le.s32.totalorder 2, %s10
      // Predicated region
      $region33: #{tpu_custom_call.1} parent=5 // pred_check
        %p165 = pneg %p164
      $region34: #{tpu_custom_call.1} parent=5 // pred_check_branch
        %167 = sbr.rel (%p165) target = $region36
      $region35: #{tpu_custom_call.1} parent=5 // pred_region
        %s168 = ssub.s32 %s10, 2
        // Predicated region
        $region37: #{tpu_custom_call.1} parent=35 // pred_check
          %p169 = pneg %p65
        $region38: #{tpu_custom_call.1} parent=35 // pred_check_branch
          %171 = sbr.rel (%p169) target = $region40
        $region39: #{tpu_custom_call.1} parent=35 // pred_region
          %s172 = smul.u32 4, %s16
          %p173 = scmp.lt.s32.totalorder %s172, 7
          %s174 = scalar_select %p173, %s172, 7
          %s175 = smul.addr %s174, 8
          %s176 = scalar_lea.vmem %s1, %s175
        $region40: #{tpu_custom_call.1} parent=35 // pred_fallthru
          _
      $region36: #{tpu_custom_call.1} parent=5 // pred_fallthru
        _
    $region6: #{tpu_custom_call.1} parent=1 // loop_footer
      %s14 = sadd.s32 1, %s10
    $region7: #{tpu_custom_call.1} parent=1 // loop_footer_branch
      %9 = sbr.rel target = $region3
    $region8: #{tpu_custom_call.1} parent=1 // loop_exit
      _
    %177 = vsyncpa [#allocation3], 1
    %s178 = scalar_lea.sflag [#allocation3], 1
    %179 = vsyncpa %s178, 1

// kernel: tpu_custom_call.1
$region0: #{tpu_custom_call.1}
  #allocation0 [shape = 'u32[]', space=smem, size = 0x4, offset = 0x4, fixed_abs, tag = 'smem constant byte address 0x4 - core index']
  #allocation1 [shape = 'u32[144,128]{1,0:T(1,128)}', space=vmem, size = 0x12000, scoped, tag = 'internal scratch']
  %s0 = inlined_call_operand.hbm [shape: f32[16,128], index: 0, kind: input, shape index: {}]
  %s1 = inlined_call_operand.hbm [shape: f32[16,128], index: 1, kind: input, shape index: {}]
  %s2 = inlined_call_operand.hbm [shape: f32[16,128], index: 2, kind: input, shape index: {}]
  %s3 = inlined_call_operand.hbm [shape: f32[16,128], index: 3, kind: input, shape index: {}]
  %s4 = inlined_call_operand.hbm [shape: f32[16,128], index: 4, kind: input, shape index: {}]
  %s5 = inlined_call_operand.hbm [shape: f32[16,128], index: 5, kind: output, shape index: {0}]
  %s6 = inlined_call_operand.hbm [shape: f32[16,128], index: 6, kind: output, shape index: {1}]
  %s7 = inlined_call_operand.hbm [shape: f32[16,128], index: 7, kind: output, shape index: {2}]
  %s8 = inlined_call_operand.hbm [shape: f32[16,128], index: 8, kind: output, shape index: {3}]
  %s9 = inlined_call_operand.hbm [shape: f32[16,128], index: 9, kind: output, shape index: {4}]
  %s10 = inlined_call_operand.hbm [shape: u8[16,128], index: 10, kind: output, shape index: {5}]
  %s11 = inlined_call_operand.hbm [shape: u8[16,128], index: 11, kind: output, shape index: {6}]
  %s12 = inlined_call_operand.hbm [shape: u8[16,128], index: 12, kind: output, shape index: {7}]
  %s13 = inlined_call_operand.hbm [shape: u8[16,128], index: 13, kind: output, shape index: {8}]
  %s14 = inlined_call_operand.hbm [shape: u8[16,128], index: 14, kind: output, shape index: {9}]
  %15 = xla_tuple %s5, %s6, %s7, %s8, %s9, %s10, %s11, %s12, %s13, %s14
  %s16 = sld [smem:[#allocation0]]
  $region122: #{tpu_custom_call.1} parent=0
    _
  %s18 = ssub.s32 1, %s16
  %s19 = scalar_select 0, %s18, %s16
  $region1: #{tpu_custom_call.1} parent=0
    #allocation2 [shape = 'u8[8192]{0}', space=vmem, size = 0x2000, scoped, tag = 'input window, operand 0, single buffered']
    #allocation3 [shape = 's32[1]{0}', space=sflag, size = 0x4, scoped, tag = 'scoped memory for tpu_custom_call.1']
    #allocation4 [shape = 's32[1]{0}', space=sflag, size = 0x4, scoped, tag = 'scoped memory for tpu_custom_call.1']
    #allocation5 [shape = 'u8[8192]{0}', space=vmem, size = 0x2000, scoped, tag = 'input window, operand 1, single buffered']
    #allocation6 [shape = 's32[1]{0}', space=sflag, size = 0x4, scoped, tag = 'scoped memory for tpu_custom_call.1']
    #allocation7 [shape = 'u8[8192]{0}', space=vmem, size = 0x2000, scoped, tag = 'input window, operand 2, single buffered']
    #allocation8 [shape = 'u8[8192]{0}', space=vmem, size = 0x2000, scoped, tag = 'input window, operand 3, single buffered']
    #allocation9 [shape = 's32[1]{0}', space=sflag, size = 0x4, scoped, tag = 'scoped memory for tpu_custom_call.1']
    #allocation10 [shape = 'u8[8192]{0}', space=vmem, size = 0x2000, scoped, tag = 'input window, operand 4, single buffered']
    #allocation11 [shape = 'u8[8192]{0}', space=vmem, size = 0x2000, scoped, tag = 'output window, operand 0, single buffered']
    #allocation12 [shape = 'u8[8192]{0}', space=vmem, size = 0x2000, scoped, tag = 'output window, operand 1, single buffered']
    #allocation13 [shape = 's32[1]{0}', space=sflag, size = 0x4, scoped, tag = 'scoped memory for tpu_custom_call.1']
    #allocation14 [shape = 'u8[8192]{0}', space=vmem, size = 0x2000, scoped, tag = 'output window, operand 2, single buffered']
    #allocation15 [shape = 'u8[8192]{0}', space=vmem, size = 0x2000, scoped, tag = 'output window, operand 3, single buffered']
    #allocation16 [shape = 's32[1]{0}', space=sflag, size = 0x4, scoped, tag = 'scoped memory for tpu_custom_call.1']
    #allocation17 [shape = 'u8[8192]{0}', space=vmem, size = 0x2000, scoped, tag = 'output window, operand 4, single buffered']
    #allocation18 [shape = 'u8[2048]{0}', space=vmem, size = 0x800, scoped, tag = 'output window, operand 5, single buffered']
    #allocation19 [shape = 's32[1]{0}', space=sflag, size = 0x4, scoped, tag = 'scoped memory for tpu_custom_call.1']
    #allocation20 [shape = 'u8[2048]{0}', space=vmem, size = 0x800, scoped, tag = 'output window, operand 6, single buffered']
    #allocation21 [shape = 'u8[2048]{0}', space=vmem, size = 0x800, scoped, tag = 'output window, operand 7, single buffered']
    #allocation22 [shape = 's32[1]{0}', space=sflag, size = 0x4, scoped, tag = 'scoped memory for tpu_custom_call.1']
    #allocation23 [shape = 'u8[2048]{0}', space=vmem, size = 0x800, scoped, tag = 'output window, operand 8, single buffered']
    #allocation24 [shape = 'u8[2048]{0}', space=vmem, size = 0x800, scoped, tag = 'output window, operand 9, single buffered']
    #allocation25 [shape = 's32[1]{0}', space=sflag, size = 0x4, scoped, tag = 'scoped memory for tpu_custom_call.1']
    %20 = vsyncpa [#allocation3], 0
    %21 = vsyncpa [#allocation6], 0
    %22 = vsyncpa [#allocation9], 0
    %23 = vsyncpa [#allocation4], 0
    %24 = vsyncpa [#allocation13], 0
    %25 = vsyncpa [#allocation16], 0
    %26 = vsyncpa [#allocation19], 0
    %27 = vsyncpa [#allocation22], 0
    %28 = vsyncpa [#allocation25], 0
    // Predicated region
    $region2: #{tpu_custom_call.1} parent=1 // pred_check
      _
    $region3: #{tpu_custom_call.1} parent=1 // pred_check_branch
      %30 = sbr.rel (0) target = $region5
    $region4: #{tpu_custom_call.1} parent=1 // pred_region
      %s32 = ssub.s32 256, 256
      %33 = vsyncadd [#allocation3], %s32
      %s34 = sshll.u32 [#allocation2], 4
      %s35 = int_to_ptr.vmem [resolvable:$true] %s34
      %40 = dma.hbm_to_vmem [thread:$0]  %s0, 256, %s35, [#allocation3], 128, 128, 8
    $region5: #{tpu_custom_call.1} parent=1 // pred_fallthru
      _
    // Predicated region
    $region6: #{tpu_custom_call.1} parent=1 // pred_check
      _
    $region7: #{tpu_custom_call.1} parent=1 // pred_check_branch
      %42 = sbr.rel (0) target = $region9
    $region8: #{tpu_custom_call.1} parent=1 // pred_region
      %s44 = ssub.s32 256, 256
      %45 = vsyncadd [#allocation6], %s44
      %s46 = sshll.u32 [#allocation5], 4
      %s47 = int_to_ptr.vmem [resolvable:$true] %s46
      %52 = dma.hbm_to_vmem [thread:$0]  %s1, 256, %s47, [#allocation6], 128, 128, 8
    $region9: #{tpu_custom_call.1} parent=1 // pred_fallthru
      _
    // Predicated region
    $region10: #{tpu_custom_call.1} parent=1 // pred_check
      _
    $region11: #{tpu_custom_call.1} parent=1 // pred_check_branch
      %54 = sbr.rel (0) target = $region13
    $region12: #{tpu_custom_call.1} parent=1 // pred_region
      %s56 = ssub.s32 256, 256
      %57 = vsyncadd [#allocation6], %s56
      %s58 = sshll.u32 [#allocation7], 4
      %s59 = int_to_ptr.vmem [resolvable:$true] %s58
      %64 = dma.hbm_to_vmem [thread:$0]  %s2, 256, %s59, [#allocation6], 128, 128, 8
    $region13: #{tpu_custom_call.1} parent=1 // pred_fallthru
      _
    // Predicated region
    $region14: #{tpu_custom_call.1} parent=1 // pred_check
      _
    $region15: #{tpu_custom_call.1} parent=1 // pred_check_branch
      %66 = sbr.rel (0) target = $region17
    $region16: #{tpu_custom_call.1} parent=1 // pred_region
      %s68 = ssub.s32 256, 256
      %69 = vsyncadd [#allocation9], %s68
      %s70 = sshll.u32 [#allocation8], 4
      %s71 = int_to_ptr.vmem [resolvable:$true] %s70
      %76 = dma.hbm_to_vmem [thread:$0]  %s3, 256, %s71, [#allocation9], 128, 128, 8
    $region17: #{tpu_custom_call.1} parent=1 // pred_fallthru
      _
    // Predicated region
    $region18: #{tpu_custom_call.1} parent=1 // pred_check
      _
    $region19: #{tpu_custom_call.1} parent=1 // pred_check_branch
      %78 = sbr.rel (0) target = $region21
    $region20: #{tpu_custom_call.1} parent=1 // pred_region
      %s80 = ssub.s32 256, 256
      %81 = vsyncadd [#allocation9], %s80
      %s82 = sshll.u32 [#allocation10], 4
      %s83 = int_to_ptr.vmem [resolvable:$true] %s82
      %88 = dma.hbm_to_vmem [thread:$0]  %s4, 256, %s83, [#allocation9], 128, 128, 8
    $region21: #{tpu_custom_call.1} parent=1 // pred_fallthru
      _
    // Predicated region
    $region22: #{tpu_custom_call.1} parent=1 // pred_check
      _
    $region23: #{tpu_custom_call.1} parent=1 // pred_check_branch
      %90 = sbr.rel (0) target = $region25
    $region24: #{tpu_custom_call.1} parent=1 // pred_region
      %91 = dma.done [#allocation3], 256
    $region25: #{tpu_custom_call.1} parent=1 // pred_fallthru
      _
    // Predicated region
    $region26: #{tpu_custom_call.1} parent=1 // pred_check
      _
    $region27: #{tpu_custom_call.1} parent=1 // pred_check_branch
      %93 = sbr.rel (0) target = $region29
    $region28: #{tpu_custom_call.1} parent=1 // pred_region
      %94 = dma.done [#allocation6], 256
    $region29: #{tpu_custom_call.1} parent=1 // pred_fallthru
      _
    // Predicated region
    $region30: #{tpu_custom_call.1} parent=1 // pred_check
      _
    $region31: #{tpu_custom_call.1} parent=1 // pred_check_branch
      %96 = sbr.rel (0) target = $region33
    $region32: #{tpu_custom_call.1} parent=1 // pred_region
      %97 = dma.done [#allocation6], 256
    $region33: #{tpu_custom_call.1} parent=1 // pred_fallthru
      _
    // Predicated region
    $region34: #{tpu_custom_call.1} parent=1 // pred_check
      _
    $region35: #{tpu_custom_call.1} parent=1 // pred_check_branch
      %99 = sbr.rel (0) target = $region37
    $region36: #{tpu_custom_call.1} parent=1 // pred_region
      %100 = dma.done [#allocation9], 256
    $region37: #{tpu_custom_call.1} parent=1 // pred_fallthru
      _
    // Predicated region
    $region38: #{tpu_custom_call.1} parent=1 // pred_check
      _
    $region39: #{tpu_custom_call.1} parent=1 // pred_check_branch
      %102 = sbr.rel (0) target = $region41
    $region40: #{tpu_custom_call.1} parent=1 // pred_region
      %103 = dma.done [#allocation9], 256
    $region41: #{tpu_custom_call.1} parent=1 // pred_fallthru
      _
    %v106 = vld [vmem:[#allocation2] sm:$0xff]
    %v107 = vld [vmem:[#allocation2 + $0x8] sm:$0xff]
    %v108 = vld [vmem:[#allocation5] sm:$0xff]
    %v109 = vld [vmem:[#allocation5 + $0x8] sm:$0xff]
    %v110 = vld [vmem:[#allocation7] sm:$0xff]
    %v111 = vld [vmem:[#allocation7 + $0x8] sm:$0xff]
    %v112 = vld [vmem:[#allocation8] sm:$0xff]
    %v113 = vld [vmem:[#allocation8 + $0x8] sm:$0xff]
    %v114 = vld [vmem:[#allocation10] sm:$0xff]
    %v115 = vld [vmem:[#allocation10 + $0x8] sm:$0xff]
    %v116 = vadd.f32 %v106, %v108
    %v117 = vadd.f32 %v107, %v109
    %118 = vst [vmem:[#allocation11] sm:$0xff] %v116
    %119 = vst [vmem:[#allocation11 + $0x8] sm:$0xff] %v117
    %v120 = vsub.f32 %v110, %v112
    %v121 = vsub.f32 %v111, %v113
    %122 = vst [vmem:[#allocation12] sm:$0xff] %v120
    %123 = vst [vmem:[#allocation12 + $0x8] sm:$0xff] %v121
    %v124 = vmul.f32 %v108, %v114
    %v125 = vmul.f32 %v109, %v115
    %126 = vst [vmem:[#allocation14] sm:$0xff] %v124
    %127 = vst [vmem:[#allocation14 + $0x8] sm:$0xff] %v125
    %v128 = vadd.f32 %v110, 1e-05
    %v129 = vadd.f32 %v111, 1e-05
    %v130 = vrcp.pop %v128
    %v131 = vmul.f32 %v112, %v130
    %v132 = vrcp.pop %v129
    %v133 = vmul.f32 %v113, %v132
    %134 = vst [vmem:[#allocation15] sm:$0xff] %v131
    %135 = vst [vmem:[#allocation15 + $0x8] sm:$0xff] %v133
    %v136 = vmul.f32 %v106, %v106
    %v137 = vmul.f32 %v107, %v107
    %138 = vst [vmem:[#allocation17] sm:$0xff] %v136
    %139 = vst [vmem:[#allocation17 + $0x8] sm:$0xff] %v137
    %vm140 = vcmp.gt.f32.partialorder %v108, %v110
    %vm141 = vcmp.gt.f32.partialorder %v109, %v111
    %vm142 = vcmp.lt.f32.partialorder %v112, %v114
    %vm143 = vcmp.lt.f32.partialorder %v113, %v115
    %vm144 = vmpackc.low %vm141, %vm140
    %vm145 = vmpackc.even %vm144, %vm144
    %v146 = vsel %vm145, 16843009, 0
    %v147 = vunpack.c.0.s8 %v146
    %v148 = vunpack.c.1.s8 %v146
    %v149 = vpack.c.b16 %v147, %v147
    %v150 = vpack.c.b8 %v149, %v149
    %v151 = vpack.c.b16 %v148, %v148
    %v152 = vpack.c.b8 %v151, %v151
    %153 = vst [vmem:[#allocation18] sm:$0x3] %v150
    %154 = vst [vmem:[#allocation18 + $0x2] sm:$0x3] %v152
    %vm155 = vmpackc.low %vm143, %vm142
    %vm156 = vmpackc.even %vm155, %vm155
    %v157 = vsel %vm156, 16843009, 0
    %v158 = vunpack.c.0.s8 %v157
    %v159 = vunpack.c.1.s8 %v157
    %v160 = vpack.c.b16 %v158, %v158
    %v161 = vpack.c.b8 %v160, %v160
    %v162 = vpack.c.b16 %v159, %v159
    %v163 = vpack.c.b8 %v162, %v162
    %164 = vst [vmem:[#allocation20] sm:$0x3] %v161
    %165 = vst [vmem:[#allocation20 + $0x2] sm:$0x3] %v163
    %vm166 = vcmp.eq.f32.partialorder %v106, %v108
    %vm167 = vcmp.eq.f32.partialorder %v107, %v109
    %vm168 = vmpackc.low %vm167, %vm166
    %vm169 = vmpackc.even %vm168, %vm168
    %v170 = vsel %vm169, 16843009, 0
    %v171 = vunpack.c.0.s8 %v170
    %v172 = vunpack.c.1.s8 %v170
    %v173 = vpack.c.b16 %v171, %v171
    %v174 = vpack.c.b8 %v173, %v173
    %v175 = vpack.c.b16 %v172, %v172
    %v176 = vpack.c.b8 %v175, %v175
    %177 = vst [vmem:[#allocation21] sm:$0x3] %v174
    %178 = vst [vmem:[#allocation21 + $0x2] sm:$0x3] %v176
    %vm179 = vcmp.ne.f32.partialorder %v110, %v114
    %vm180 = vcmp.ne.f32.partialorder %v111, %v115
    %vm181 = vmpackc.low %vm180, %vm179
    %vm182 = vmpackc.even %vm181, %vm181
    %v183 = vsel %vm182, 16843009, 0
    %v184 = vunpack.c.0.s8 %v183
    %v185 = vunpack.c.1.s8 %v183
    %v186 = vpack.c.b16 %v184, %v184
    %v187 = vpack.c.b8 %v186, %v186
    %v188 = vpack.c.b16 %v185, %v185
    %v189 = vpack.c.b8 %v188, %v188
    %190 = vst [vmem:[#allocation23] sm:$0x3] %v187
    %191 = vst [vmem:[#allocation23 + $0x2] sm:$0x3] %v189
    %vm192 = vmand %vm140, %vm142
    %vm193 = vmand %vm141, %vm143
    %vm194 = vmpackc.low %vm193, %vm192
    %vm195 = vmpackc.even %vm194, %vm194
    %v196 = vsel %vm195, 16843009, 0
    %v197 = vunpack.c.0.s8 %v196
    %v198 = vunpack.c.1.s8 %v196
    %v199 = vpack.c.b16 %v197, %v197
    %v200 = vpack.c.b8 %v199, %v199
    %v201 = vpack.c.b16 %v198, %v198
    %v202 = vpack.c.b8 %v201, %v201
    %203 = vst [vmem:[#allocation24] sm:$0x3] %v200
    %204 = vst [vmem:[#allocation24 + $0x2] sm:$0x3] %v202
    // Predicated region
    $region42: #{tpu_custom_call.1} parent=1 // pred_check
      _
    $region43: #{tpu_custom_call.1} parent=1 // pred_check_branch
      %206 = sbr.rel (0) target = $region45
    $region44: #{tpu_custom_call.1} parent=1 // pred_region
      %s208 = ssub.s32 256, 256
      %209 = vsyncadd [#allocation4], %s208
      %s210 = sshll.u32 [#allocation11], 4
      %s211 = int_to_ptr.vmem [resolvable:$true] %s210
      %216 = dma.vmem_to_hbm [thread:$0]  %s211, 256, %s5, [#allocation4], 128, 128, 8
    $region45: #{tpu_custom_call.1} parent=1 // pred_fallthru
      _
    // Predicated region
    $region46: #{tpu_custom_call.1} parent=1 // pred_check
      _
    $region47: #{tpu_custom_call.1} parent=1 // pred_check_branch
      %218 = sbr.rel (0) target = $region49
    $region48: #{tpu_custom_call.1} parent=1 // pred_region
      %s220 = ssub.s32 256, 256
      %221 = vsyncadd [#allocation13], %s220
      %s222 = sshll.u32 [#allocation12], 4
      %s223 = int_to_ptr.vmem [resolvable:$true] %s222
      %228 = dma.vmem_to_hbm [thread:$0]  %s223, 256, %s6, [#allocation13], 128, 128, 8
    $region49: #{tpu_custom_call.1} parent=1 // pred_fallthru
      _
    // Predicated region
    $region50: #{tpu_custom_call.1} parent=1 // pred_check
      _
    $region51: #{tpu_custom_call.1} parent=1 // pred_check_branch
      %230 = sbr.rel (0) target = $region53
    $region52: #{tpu_custom_call.1} parent=1 // pred_region
      %s232 = ssub.s32 256, 256
      %233 = vsyncadd [#allocation13], %s232
      %s234 = sshll.u32 [#allocation14], 4
      %s235 = int_to_ptr.vmem [resolvable:$true] %s234
      %240 = dma.vmem_to_hbm [thread:$0]  %s235, 256, %s7, [#allocation13], 128, 128, 8
    $region53: #{tpu_custom_call.1} parent=1 // pred_fallthru
      _
    // Predicated region
    $region54: #{tpu_custom_call.1} parent=1 // pred_check
      _
    $region55: #{tpu_custom_call.1} parent=1 // pred_check_branch
      %242 = sbr.rel (0) target = $region57
    $region56: #{tpu_custom_call.1} parent=1 // pred_region
      %s244 = ssub.s32 256, 256
      %245 = vsyncadd [#allocation16], %s244
      %s246 = sshll.u32 [#allocation15], 4
      %s247 = int_to_ptr.vmem [resolvable:$true] %s246
      %252 = dma.vmem_to_hbm [thread:$0]  %s247, 256, %s8, [#allocation16], 128, 128, 8
    $region57: #{tpu_custom_call.1} parent=1 // pred_fallthru
      _
    // Predicated region
    $region58: #{tpu_custom_call.1} parent=1 // pred_check
      _
    $region59: #{tpu_custom_call.1} parent=1 // pred_check_branch
      %254 = sbr.rel (0) target = $region61
    $region60: #{tpu_custom_call.1} parent=1 // pred_region
      %s256 = ssub.s32 256, 256
      %257 = vsyncadd [#allocation16], %s256
      %s258 = sshll.u32 [#allocation17], 4
      %s259 = int_to_ptr.vmem [resolvable:$true] %s258
      %264 = dma.vmem_to_hbm [thread:$0]  %s259, 256, %s9, [#allocation16], 128, 128, 8
    $region61: #{tpu_custom_call.1} parent=1 // pred_fallthru
      _
    // Predicated region
    $region62: #{tpu_custom_call.1} parent=1 // pred_check
      _
    $region63: #{tpu_custom_call.1} parent=1 // pred_check_branch
      %266 = sbr.rel (0) target = $region65
    $region64: #{tpu_custom_call.1} parent=1 // pred_region
      %s268 = ssub.s32 64, 64
      %269 = vsyncadd [#allocation19], %s268
      %s270 = sshll.u32 [#allocation18], 4
      %s271 = int_to_ptr.vmem [resolvable:$true] %s270
      %276 = dma.vmem_to_hbm [thread:$0]  %s271, 64, %s10, [#allocation19], 32, 32, 2
    $region65: #{tpu_custom_call.1} parent=1 // pred_fallthru
      _
    // Predicated region
    $region66: #{tpu_custom_call.1} parent=1 // pred_check
      _
    $region67: #{tpu_custom_call.1} parent=1 // pred_check_branch
      %278 = sbr.rel (0) target = $region69
    $region68: #{tpu_custom_call.1} parent=1 // pred_region
      %s280 = ssub.s32 64, 64
      %281 = vsyncadd [#allocation19], %s280
      %s282 = sshll.u32 [#allocation20], 4
      %s283 = int_to_ptr.vmem [resolvable:$true] %s282
      %288 = dma.vmem_to_hbm [thread:$0]  %s283, 64, %s11, [#allocation19], 32, 32, 2
    $region69: #{tpu_custom_call.1} parent=1 // pred_fallthru
      _
    // Predicated region
    $region70: #{tpu_custom_call.1} parent=1 // pred_check
      _
    $region71: #{tpu_custom_call.1} parent=1 // pred_check_branch
      %290 = sbr.rel (0) target = $region73
    $region72: #{tpu_custom_call.1} parent=1 // pred_region
      %s292 = ssub.s32 64, 64
      %293 = vsyncadd [#allocation22], %s292
      %s294 = sshll.u32 [#allocation21], 4
      %s295 = int_to_ptr.vmem [resolvable:$true] %s294
      %300 = dma.vmem_to_hbm [thread:$0]  %s295, 64, %s12, [#allocation22], 32, 32, 2
    $region73: #{tpu_custom_call.1} parent=1 // pred_fallthru
      _
    // Predicated region
    $region74: #{tpu_custom_call.1} parent=1 // pred_check
      _
    $region75: #{tpu_custom_call.1} parent=1 // pred_check_branch
      %302 = sbr.rel (0) target = $region77
    $region76: #{tpu_custom_call.1} parent=1 // pred_region
      %s304 = ssub.s32 64, 64
      %305 = vsyncadd [#allocation22], %s304
      %s306 = sshll.u32 [#allocation23], 4
      %s307 = int_to_ptr.vmem [resolvable:$true] %s306
      %312 = dma.vmem_to_hbm [thread:$0]  %s307, 64, %s13, [#allocation22], 32, 32, 2
    $region77: #{tpu_custom_call.1} parent=1 // pred_fallthru
      _
    // Predicated region
    $region78: #{tpu_custom_call.1} parent=1 // pred_check
      _
    $region79: #{tpu_custom_call.1} parent=1 // pred_check_branch
      %314 = sbr.rel (0) target = $region81
    $region80: #{tpu_custom_call.1} parent=1 // pred_region
      %s316 = ssub.s32 64, 64
      %317 = vsyncadd [#allocation25], %s316
      %s318 = sshll.u32 [#allocation24], 4
      %s319 = int_to_ptr.vmem [resolvable:$true] %s318
      %324 = dma.vmem_to_hbm [thread:$0]  %s319, 64, %s14, [#allocation25], 32, 32, 2
    $region81: #{tpu_custom_call.1} parent=1 // pred_fallthru
      _
    // Predicated region
    $region82: #{tpu_custom_call.1} parent=1 // pred_check
      _
    $region83: #{tpu_custom_call.1} parent=1 // pred_check_branch
      %326 = sbr.rel (0) target = $region85
    $region84: #{tpu_custom_call.1} parent=1 // pred_region
      %327 = dma.done [#allocation4], 256
    $region85: #{tpu_custom_call.1} parent=1 // pred_fallthru
      _
    // Predicated region
    $region86: #{tpu_custom_call.1} parent=1 // pred_check
      _
    $region87: #{tpu_custom_call.1} parent=1 // pred_check_branch
      %329 = sbr.rel (0) target = $region89
    $region88: #{tpu_custom_call.1} parent=1 // pred_region
      %330 = dma.done [#allocation13], 256
    $region89: #{tpu_custom_call.1} parent=1 // pred_fallthru
      _
    // Predicated region
    $region90: #{tpu_custom_call.1} parent=1 // pred_check
      _
    $region91: #{tpu_custom_call.1} parent=1 // pred_check_branch
      %332 = sbr.rel (0) target = $region93
    $region92: #{tpu_custom_call.1} parent=1 // pred_region
      %333 = dma.done [#allocation13], 256
    $region93: #{tpu_custom_call.1} parent=1 // pred_fallthru
      _
    // Predicated region
    $region94: #{tpu_custom_call.1} parent=1 // pred_check
      _
    $region95: #{tpu_custom_call.1} parent=1 // pred_check_branch
      %335 = sbr.rel (0) target = $region97
    $region96: #{tpu_custom_call.1} parent=1 // pred_region
      %336 = dma.done [#allocation16], 256
    $region97: #{tpu_custom_call.1} parent=1 // pred_fallthru
      _
    // Predicated region
    $region98: #{tpu_custom_call.1} parent=1 // pred_check
      _
    $region99: #{tpu_custom_call.1} parent=1 // pred_check_branch
      %338 = sbr.rel (0) target = $region101
    $region100: #{tpu_custom_call.1} parent=1 // pred_region
      %339 = dma.done [#allocation16], 256
    $region101: #{tpu_custom_call.1} parent=1 // pred_fallthru
      _
    // Predicated region
    $region102: #{tpu_custom_call.1} parent=1 // pred_check
      _
    $region103: #{tpu_custom_call.1} parent=1 // pred_check_branch
      %341 = sbr.rel (0) target = $region105
    $region104: #{tpu_custom_call.1} parent=1 // pred_region
      %342 = dma.done [#allocation19], 64
    $region105: #{tpu_custom_call.1} parent=1 // pred_fallthru
      _
    // Predicated region
    $region106: #{tpu_custom_call.1} parent=1 // pred_check
      _
    $region107: #{tpu_custom_call.1} parent=1 // pred_check_branch
      %344 = sbr.rel (0) target = $region109
    $region108: #{tpu_custom_call.1} parent=1 // pred_region
      %345 = dma.done [#allocation19], 64
    $region109: #{tpu_custom_call.1} parent=1 // pred_fallthru
      _
    // Predicated region
    $region110: #{tpu_custom_call.1} parent=1 // pred_check
      _
    $region111: #{tpu_custom_call.1} parent=1 // pred_check_branch
      %347 = sbr.rel (0) target = $region113
    $region112: #{tpu_custom_call.1} parent=1 // pred_region
      %348 = dma.done [#allocation22], 64
    $region113: #{tpu_custom_call.1} parent=1 // pred_fallthru
      _
    // Predicated region
    $region114: #{tpu_custom_call.1} parent=1 // pred_check
      _
    $region115: #{tpu_custom_call.1} parent=1 // pred_check_branch
      %350 = sbr.rel (0) target = $region117
    $region116: #{tpu_custom_call.1} parent=1 // pred_region
      %351 = dma.done [#allocation22], 64
    $region117: #{tpu_custom_call.1} parent=1 // pred_fallthru
      _
    // Predicated region
    $region118: #{tpu_custom_call.1} parent=1 // pred_check
      _
    $region119: #{tpu_custom_call.1} parent=1 // pred_check_branch
      %353 = sbr.rel (0) target = $region121
    $region120: #{tpu_custom_call.1} parent=1 // pred_region
      %354 = dma.done [#allocation25], 64
    $region121: #{tpu_custom_call.1} parent=1 // pred_fallthru
      _
    %355 = vsyncpa [#allocation3], 1
    %356 = vsyncpa [#allocation6], 1
    %357 = vsyncpa [#allocation9], 1
    %358 = vsyncpa [#allocation4], 1
    %359 = vsyncpa [#allocation13], 1
    %360 = vsyncpa [#allocation16], 1
    %361 = vsyncpa [#allocation19], 1
    %362 = vsyncpa [#allocation22], 1
    %363 = vsyncpa [#allocation25], 1

</llo_original>
